<compile_context>
chip_gen: v5e
topology: v5e:2x2
jax: 0.10.0
libtpu: 0.0.40
codegen_flags: <defaults>
</compile_context>

<pallas_src>
import math

import jax
import jax.numpy as jnp
from jax import lax
from jax.experimental import pallas as pl
from jax.experimental.pallas import tpu as pltpu


# ---------------------------------------------------------------------------
# DCT filter construction (host-side glue — mirrors get_dct_filter)
# ---------------------------------------------------------------------------
def _build_filter_1d(pos, freq, POS):
    result = math.cos(math.pi * freq * (pos + 0.5) / POS) / math.sqrt(POS)
    if freq == 0:
        return result
    return result * math.sqrt(2)


def get_dct_filter(height, width, mapper_x, mapper_y, channel):
    """Deterministic DCT filter, shape (channel, height, width), float32."""
    assert len(mapper_x) == len(mapper_y)
    num_freq = len(mapper_x)
    c_part = channel // num_freq
    filt = [[0.0] * (height * width) for _ in range(channel)]
    for i, (u_x, v_y) in enumerate(zip(mapper_x, mapper_y)):
        for t_x in range(height):
            fx = _build_filter_1d(t_x, u_x, height)
            for t_y in range(width):
                val = fx * _build_filter_1d(t_y, v_y, width)
                for c in range(i * c_part, (i + 1) * c_part):
                    filt[c][t_x * width + t_y] = val
    return jnp.asarray(filt, dtype=jnp.float32).reshape(channel, height, width)


# ---------------------------------------------------------------------------
# Tiling / VMEM helpers
# ---------------------------------------------------------------------------
def _round_up(v, m):
    return -(-v // m) * m


def _vmem_limits():
    """(vmem_limit_bytes, buffer_budget_bytes), generation-aware."""
    cap = None
    try:
        info = pltpu.get_tpu_info()
        cap = getattr(info, "vmem_capacity_bytes", None)
    except Exception:  # pragma: no cover - info query is best-effort
        cap = None
    if not cap or cap <= 0:
        # Conservative fallback: v7x has only 64 MiB per TensorCore.
        cap = 64 * 1024 * 1024
    limit = min(int(cap * 0.85), 112 * 1024 * 1024)   # leave compiler headroom
    limit = max(limit, 32 * 1024 * 1024)
    budget = int(limit * 0.70)                        # budget for our buffers
    return limit, budget


def _choose_channel_tile(C, HW):
    """Channel tile: multiple of 128 (lane-dense output) dividing C, or C."""
    hw_pad = _round_up(HW, 128)
    # Cap the per-tile filter slab (~2 MiB f32) so the fixed VMEM cost
    # (filter double-buffer + in-kernel f32 temps) stays small.
    max_tc = max(128, (2 * 1024 * 1024) // (hw_pad * 4))
    if C <= max_tc:
        return C
    t = (max_tc // 128) * 128
    while t >= 128:
        if C % t == 0:
            return t
        t -= 128
    return C


def _pick_tb(N, max_tb):
    """Batch tile: prefer multiples of 8 that divide N; never exceed max_tb."""
    max_tb = max(1, min(max_tb, N))
    if max_tb >= N:
        return N
    t = (max_tb // 8) * 8
    while t >= 8:
        if N % t == 0:
            return t                      # aligned AND divides N
        t -= 8
    t = (max_tb // 8) * 8
    if t >= 8:
        return t                          # aligned; ragged last tile is masked
    for d in range(max_tb, 0, -1):
        if N % d == 0:
            return d                      # tiny N: exact divisor
    return 1


def _choose_batch_tile(N, HW, tc, x_itemsize, out_itemsize, budget):
    """Largest batch tile whose full VMEM footprint fits the budget."""
    hw_pad = _round_up(HW, 128)            # lane granule
    tc_sub = _round_up(tc, 8)              # sublane granule
    row = tc_sub * hw_pad                  # padded elems per (batch, channel-tile)
    fixed = (2 * row * 4                   # double-buffered filter block (f32)
             + row * 4                     # in-kernel f32 copy of the filter
             + 2 * 8 * row * 4)            # per-chunk f32 upcast + product temps
    per_tb = (2 * row * x_itemsize         # double-buffered x block
              + 2 * _round_up(tc, 128) * out_itemsize)  # output buffers
    max_tb = max(1, int((budget - fixed) // per_tb))
    return _pick_tb(N, max_tb)


# ---------------------------------------------------------------------------
# Pallas kernel: multiply-by-filter + spatial reduction (NCHW-native)
# ---------------------------------------------------------------------------
def dct_reduce_kernel(x_ref, w_ref, o_ref):
    # x_ref: (TB, TC, HW)  NCHW-native slab; TC on sublanes, HW on lanes
    # w_ref: (TC, HW)      DCT filter tile (float32)
    # o_ref: (TB, TC)      pooled output tile; channels on lanes
    w = w_ref[...].astype(jnp.float32)            # loaded once per block
    tb = x_ref.shape[0]
    sub = 8 if tb >= 8 else tb                    # small batch sub-chunks keep
    n_full = tb // sub                            # the f32 temps tiny
    rem = tb - n_full * sub

    def body(i, carry):
        off = pl.multiple_of(i * sub, sub)
        xs = x_ref[pl.ds(off, sub), :, :].astype(jnp.float32)
        o_ref[pl.ds(off, sub), :] = jnp.sum(xs * w, axis=-1).astype(o_ref.dtype)
        return carry

    lax.fori_loop(0, n_full, body, 0, unroll=(n_full <= 8))

    if rem:                                       # static (trace-time) tail
        off = n_full * sub
        xs = x_ref[pl.ds(off, rem), :, :].astype(jnp.float32)
        o_ref[pl.ds(off, rem), :] = jnp.sum(xs * w, axis=-1).astype(o_ref.dtype)


def multi_spectral_dct_layer(x, weight, *, batch_tile=None, channel_tile=None):
    """x: (N, C, H, W); weight: (C, H, W) -> (N, C) (float32, torch promotion)."""
    N, C, H, W = x.shape
    assert weight.shape == (C, H, W)
    HW = H * W

    # Free reshapes only — no HBM transpose pass.
    x_flat = x.reshape(N, C, HW)
    w_flat = weight.reshape(C, HW).astype(jnp.float32)
    out_dtype = jnp.promote_types(x.dtype, jnp.float32)

    limit, budget = _vmem_limits()
    tc = channel_tile if channel_tile is not None else _choose_channel_tile(C, HW)
    assert C % tc == 0, "channel tile must divide C"
    tb = batch_tile if batch_tile is not None else _choose_batch_tile(
        N, HW, tc, jnp.dtype(x.dtype).itemsize, jnp.dtype(out_dtype).itemsize,
        budget)

    nc = C // tc
    nb = pl.cdiv(N, tb)
    # v7x has two TensorCores: keep >= 2 parallel grid steps when there is
    # enough work so both cores get a share.
    if nb * nc == 1 and N >= 16:
        tb = _pick_tb(N, _round_up(-(-N // 2), 8))
        nb = pl.cdiv(N, tb)

    # TODO(synk): for C < 128 a lane-folding layout (fold a factor of HW into
    # the lane axis) would recover dense lanes; skipped — C >= 128 in deployed
    # FcaNet stages and the padded layout is still correct.

    out = pl.pallas_call(
        dct_reduce_kernel,
        out_shape=jax.ShapeDtypeStruct((N, C), out_dtype),
        grid_spec=pltpu.PrefetchScalarGridSpec(
            num_scalar_prefetch=0,
            grid=(nb, nc),
            in_specs=[
                pl.BlockSpec((tb, tc, HW), lambda b, c: (b, c, 0)),
                pl.BlockSpec((tc, HW), lambda b, c: (c, 0)),
            ],
            out_specs=pl.BlockSpec((tb, tc), lambda b, c: (b, c)),
        ),
        compiler_params=pltpu.CompilerParams(
            dimension_semantics=("parallel", "parallel"),
            vmem_limit_bytes=limit,
        ),
    )(x_flat, w_flat)
    return out


# ---------------------------------------------------------------------------
# Reference (pure JAX) for sanity checking
# ---------------------------------------------------------------------------
def reference_forward(x, weight):
    return jnp.sum(x.astype(jnp.float32) * weight[None].astype(jnp.float32),
                   axis=(2, 3))


if __name__ == "__main__":
    # Small deterministic example consistent with the module's forward:
    # batch=2, channels=4, spatial 16x16, 4 selected DCT frequencies.
    N, C, H, W = 2, 4, 16, 16
    mapper_x = [0, 0, 1, 1]
    mapper_y = [0, 1, 0, 1]

    key = jax.random.PRNGKey(0)
    x = jax.random.normal(key, (N, C, H, W), dtype=jnp.float32)

    weight = get_dct_filter(H, W, mapper_x, mapper_y, C)    # (C, H, W)

    out = jax.block_until_ready(multi_spectral_dct_layer(x, weight))
    ref = reference_forward(x, weight)

    assert out.shape == (N, C)
    assert jnp.allclose(out, ref, atol=1e-4, rtol=1e-4), (out, ref)

    print("KERNEL_OK")
</pallas_src>

<mosaic_0001>
module attributes {stable_mosaic.version = 11 : i64} {
  func.func @dct_reduce_kernel(%arg0: i32, %arg1: i32, %arg2: memref<2x4x256xf32, #tpu.memory_space<vmem>>, %arg3: memref<4x256xf32, #tpu.memory_space<vmem>>, %arg4: memref<2x4xf32, #tpu.memory_space<vmem>>) attributes {dimension_semantics = [#tpu.dimension_semantics<parallel>, #tpu.dimension_semantics<parallel>], iteration_bounds = array<i64: 1, 1>, scalar_prefetch = 0 : i64, scratch_operands = 0 : i64, tpu.core_type = #tpu.core_type<tc>, window_params = [{transform_indices = @transform_0, window_bounds = array<i64: 2, 4, 256>}, {transform_indices = @transform_1, window_bounds = array<i64: 4, 256>}, {transform_indices = @transform_2, window_bounds = array<i64: 2, 4>}]} {
    %c0 = arith.constant 0 : index
    %c0_0 = arith.constant 0 : index
    %0 = vector.load %arg3[%c0, %c0_0] : memref<4x256xf32, #tpu.memory_space<vmem>>, vector<4x256xf32>
    %c0_i32 = arith.constant 0 : i32
    %c2_i32 = arith.constant 2 : i32
    %1 = arith.muli %c0_i32, %c2_i32 : i32
    %2 = tpu.assume_multiple %1, 2 : i32
    %3 = arith.index_cast %2 : i32 to index
    %c0_1 = arith.constant 0 : index
    %c0_2 = arith.constant 0 : index
    %4 = vector.load %arg2[%3, %c0_1, %c0_2] : memref<2x4x256xf32, #tpu.memory_space<vmem>>, vector<2x4x256xf32>
    %5 = vector.shape_cast %0 : vector<4x256xf32> to vector<1x4x256xf32>
    %6 = vector.broadcast %5 : vector<1x4x256xf32> to vector<2x4x256xf32>
    %7 = arith.mulf %4, %6 : vector<2x4x256xf32>
    %cst = arith.constant dense<0.000000e+00> : vector<2x4xf32>
    %8 = vector.multi_reduction <add>, %7, %cst [2] : vector<2x4x256xf32> to vector<2x4xf32>
    %9 = arith.index_cast %2 : i32 to index
    %c0_3 = arith.constant 0 : index
    %10 = vector.load %arg4[%9, %c0_3] : memref<2x4xf32, #tpu.memory_space<vmem>>, vector<2x4xf32>
    tpu.vector_store %arg4[%9, %c0_3], %8 {strides = array<i32>} : memref<2x4xf32, #tpu.memory_space<vmem>>, vector<2x4xf32>,
    %c1_i32 = arith.constant 1 : i32
    return
  }
  func.func @transform_0(%arg0: i32, %arg1: i32) -> (i32, i32, i32) {
    %c0_i32 = arith.constant 0 : i32
    %c0_i32_0 = arith.constant 0 : i32
    return %arg0, %arg1, %c0_i32 : i32, i32, i32
  }
  func.func @transform_1(%arg0: i32, %arg1: i32) -> (i32, i32) {
    %c0_i32 = arith.constant 0 : i32
    %c0_i32_0 = arith.constant 0 : i32
    return %arg1, %c0_i32 : i32, i32
  }
  func.func @transform_2(%arg0: i32, %arg1: i32) -> (i32, i32) {
    %c0_i32 = arith.constant 0 : i32
    return %arg0, %arg1 : i32, i32
  }
}

</mosaic_0001>

<llo_original>
// kernel: tpu_custom_call.1
$region0: #{tpu_custom_call.1}
  #allocation0 [shape = 'u32[]', space=smem, size = 0x4, offset = 0x4, fixed_abs, tag = 'smem constant byte address 0x4 - core index']
  #allocation1 [shape = 'u32[72,128]{1,0:T(1,128)}', space=vmem, size = 0x9000, scoped, tag = 'internal scratch']
  %s0 = inlined_call_operand.hbm [shape: f32[2,4,256], index: 0, kind: input, shape index: {}]
  %s1 = inlined_call_operand.hbm [shape: f32[4,256], index: 1, kind: input, shape index: {}]
  %s2 = inlined_call_operand.hbm [shape: f32[2,4], index: 2, kind: output, shape index: {}]
  %s3 = sld [smem:[#allocation0]]
  $region26: #{tpu_custom_call.1} parent=0
    _
  %s5 = ssub.s32 1, %s3
  %s6 = scalar_select 0, %s5, %s3
  $region1: #{tpu_custom_call.1} parent=0
    #allocation2 [shape = 'u8[8192]{0}', space=vmem, size = 0x2000, scoped, tag = 'input window, operand 0, single buffered']
    #allocation3 [shape = 's32[1]{0}', space=sflag, size = 0x4, scoped, tag = 'scoped memory for tpu_custom_call.1']
    #allocation4 [shape = 's32[1]{0}', space=sflag, size = 0x4, scoped, tag = 'scoped memory for tpu_custom_call.1']
    #allocation5 [shape = 'u8[4096]{0}', space=vmem, size = 0x1000, scoped, tag = 'input window, operand 1, single buffered']
    #allocation6 [shape = 's32[1]{0}', space=sflag, size = 0x4, scoped, tag = 'scoped memory for tpu_custom_call.1']
    #allocation7 [shape = 'u8[1024]{0}', space=vmem, size = 0x400, scoped, tag = 'output window, operand 0, single buffered']
    %7 = vsyncpa [#allocation3], 0
    %8 = vsyncpa [#allocation6], 0
    %9 = vsyncpa [#allocation4], 0
    // Predicated region
    $region2: #{tpu_custom_call.1} parent=1 // pred_check
      _
    $region3: #{tpu_custom_call.1} parent=1 // pred_check_branch
      %11 = sbr.rel (0) target = $region5
    $region4: #{tpu_custom_call.1} parent=1 // pred_region
      %13 = vsyncadd [#allocation3], 0
      %s14 = sshll.u32 %s0, 4
      %s15 = int_to_ptr.hbm [resolvable:$true] %s14
      %s16 = sshll.u32 [#allocation2], 4
      %s17 = int_to_ptr.vmem [resolvable:$true] %s16
      %22 = dma.hbm_to_vmem [thread:$0]  %s15, 256, %s17, [#allocation3], 128, 128, 8
    $region5: #{tpu_custom_call.1} parent=1 // pred_fallthru
      _
    // Predicated region
    $region6: #{tpu_custom_call.1} parent=1 // pred_check
      _
    $region7: #{tpu_custom_call.1} parent=1 // pred_check_branch
      %24 = sbr.rel (0) target = $region9
    $region8: #{tpu_custom_call.1} parent=1 // pred_region
      %26 = vsyncadd [#allocation6], 0
      %s28 = sshll.u32 %s1, 4
      %s29 = int_to_ptr.hbm [resolvable:$true] %s28
      %s30 = sshll.u32 [#allocation5], 4
      %s31 = int_to_ptr.vmem [resolvable:$true] %s30
      %33 = dma.hbm_to_vmem [thread:$0]  %s29, 128, %s31, [#allocation6]
    $region9: #{tpu_custom_call.1} parent=1 // pred_fallthru
      _
    // Predicated region
    $region10: #{tpu_custom_call.1} parent=1 // pred_check
      _
    $region11: #{tpu_custom_call.1} parent=1 // pred_check_branch
      %35 = sbr.rel (0) target = $region13
    $region12: #{tpu_custom_call.1} parent=1 // pred_region
      %37 = dma.done [#allocation3], 256
    $region13: #{tpu_custom_call.1} parent=1 // pred_fallthru
      _
    // Predicated region
    $region14: #{tpu_custom_call.1} parent=1 // pred_check
      _
    $region15: #{tpu_custom_call.1} parent=1 // pred_check_branch
      %39 = sbr.rel (0) target = $region17
    $region16: #{tpu_custom_call.1} parent=1 // pred_region
      %41 = dma.done [#allocation6], 128
    $region17: #{tpu_custom_call.1} parent=1 // pred_fallthru
      _
    %v42 = vld [vmem:[#allocation5] sm:$0xff]
    %s43 = smul.u32 0, 2
    %s44 = smul.addr %s43, 4
    %s45 = scalar_lea.vmem [#allocation2], %s44
    %v46 = vld [vmem:[%s45] sm:$0xff]
    %v47 = vld [vmem:[%s45 + $0x8] sm:$0xff]
    %v48 = vmul.f32 %v46, %v42
    %v49 = vmul.f32 %v47, %v42
    %52 = vst [vmem:[#allocation1] ss:$2 sm:$0xff] %v48
    %v53 = vld.sshfl [vmem:[#allocation1] sm:$0xff pattern:$0x75316420]
    %v54 = vld.sshfl [vmem:[#allocation1 + $0x8] sm:$0xff pattern:$0x75316420]
    %s55 = scalar_lea.vmem [#allocation1], 16
    %56 = vst [vmem:[%s55] ss:$2 sm:$0xff] %v49
    %v57 = vld.sshfl [vmem:[#allocation1 + $0x10] sm:$0xff pattern:$0x75316420]
    %v58 = vld.sshfl [vmem:[#allocation1 + $0x18] sm:$0xff pattern:$0x75316420]
    %vm63 = vcmask 1043456
    %v64 = vsel %vm63, %v53, 0.0
    %v65 = vsel %vm63, %v54, 0.0
    %v66 = vadd.f32 %v64, %v65
    %67 = vadd.xlane.f32.xlu0 %v66
    %v68 = vpop.xlane.xlu0 %67
    %v69 = vsel %vm63, %v57, 0.0
    %v70 = vsel %vm63, %v58, 0.0
    %v71 = vadd.f32 %v69, %v70
    %72 = vadd.xlane.f32.xlu0 %v71
    %v73 = vpop.xlane.xlu0 %72
    %v76 = vlaneseq
    %v77 = vand.u32 %v76, 127
    %v78 = vperm.slane %v68, %v77
    %v79 = vperm.slane %v73, %v77
    %vm80 = vcmask 1041409
    %v81 = vsel %vm80, %v79, %v78
    %vm83 = vcmask 25600
    %84 = vst.msk [vmem:[#allocation7] sm:$0x3] %vm83, %v81
    // Predicated region
    $region18: #{tpu_custom_call.1} parent=1 // pred_check
      _
    $region19: #{tpu_custom_call.1} parent=1 // pred_check_branch
      %86 = sbr.rel (0) target = $region21
    $region20: #{tpu_custom_call.1} parent=1 // pred_region
      %88 = vsyncadd [#allocation4], 0
      %s90 = sshll.u32 [#allocation7], 4
      %s91 = int_to_ptr.vmem [resolvable:$true] %s90
      %s92 = sshll.u32 %s2, 4
      %s93 = int_to_ptr.hbm [resolvable:$true] %s92
      %95 = dma.vmem_to_hbm [thread:$0]  %s91, 32, %s93, [#allocation4]
    $region21: #{tpu_custom_call.1} parent=1 // pred_fallthru
      _
    // Predicated region
    $region22: #{tpu_custom_call.1} parent=1 // pred_check
      _
    $region23: #{tpu_custom_call.1} parent=1 // pred_check_branch
      %97 = sbr.rel (0) target = $region25
    $region24: #{tpu_custom_call.1} parent=1 // pred_region
      %99 = dma.done [#allocation4], 32
    $region25: #{tpu_custom_call.1} parent=1 // pred_fallthru
      _
    %100 = vsyncpa [#allocation3], 1
    %101 = vsyncpa [#allocation6], 1
    %102 = vsyncpa [#allocation4], 1

</llo_original>
